<compile_context>
chip_gen: v7x
topology: tpu7x:2x2x1
jax: 0.10.0
libtpu: 0.0.40
codegen_flags: <defaults>
</compile_context>

<pallas_src>
import jax
import jax.numpy as jnp
from jax.experimental import pallas as pl
from jax.experimental.pallas import tpu as pltpu


# --------------------------------------------------------------------------
# Scalar kernel: pure SMEM path, single scalar multiply.
# --------------------------------------------------------------------------
def _mul_int_kernel(lhs_ref, rhs_ref, out_ref):
    out_ref[0] = lhs_ref[0] * rhs_ref[0]


@jax.jit
def mul_int(lhs, rhs):
    """lhs, rhs: scalar integers (python ints or 0-d/1-d int arrays).

    Returns a 0-d int32 device array equal to lhs * rhs (int32 wraparound
    semantics).  No host sync is performed here — consume the result inside
    further jitted code or read it back once per batch of calls.
    """
    lhs_arr = jnp.asarray(lhs, dtype=jnp.int32).reshape((1,))
    rhs_arr = jnp.asarray(rhs, dtype=jnp.int32).reshape((1,))
    out = pl.pallas_call(
        _mul_int_kernel,
        out_shape=jax.ShapeDtypeStruct((1,), jnp.int32),
        in_specs=[
            pl.BlockSpec(memory_space=pltpu.SMEM),
            pl.BlockSpec(memory_space=pltpu.SMEM),
        ],
        out_specs=pl.BlockSpec(memory_space=pltpu.SMEM),
    )(lhs_arr, rhs_arr)
    return out[0]


# --------------------------------------------------------------------------
# Batched kernel: N scalar products in one launch (VPU path, lane-dense).
# --------------------------------------------------------------------------
def _mul_int_batched_kernel(lhs_ref, rhs_ref, out_ref):
    out_ref[...] = lhs_ref[...] * rhs_ref[...]


@jax.jit
def mul_int_batched(lhs, rhs):
    """Elementwise int32 product of two (N,) arrays in a single pallas_call.

    Amortizes the per-launch overhead across N products; inputs are padded to
    a (rows, 128) lane-dense layout (rows a multiple of 8) so the store is an
    unmasked vst.
    """
    lhs_arr = jnp.asarray(lhs, dtype=jnp.int32).reshape(-1)
    rhs_arr = jnp.asarray(rhs, dtype=jnp.int32).reshape(-1)
    n = lhs_arr.shape[0]
    padded = max(1024, ((n + 1023) // 1024) * 1024)  # multiple of 8*128
    lhs_2d = jnp.pad(lhs_arr, (0, padded - n)).reshape(padded // 128, 128)
    rhs_2d = jnp.pad(rhs_arr, (0, padded - n)).reshape(padded // 128, 128)
    out = pl.pallas_call(
        _mul_int_batched_kernel,
        out_shape=jax.ShapeDtypeStruct(lhs_2d.shape, jnp.int32),
    )(lhs_2d, rhs_2d)
    return out.reshape(-1)[:n]


if __name__ == "__main__":
    key = jax.random.PRNGKey(0)
    k1, k2, k3, k4 = jax.random.split(key, 4)

    # Scalar case (matches MulIntModule's forward signature): small magnitudes
    # so the int32-narrowed product cannot overflow.
    lhs = jax.random.randint(k1, (), minval=-100, maxval=100, dtype=jnp.int32)
    rhs = jax.random.randint(k2, (), minval=-100, maxval=100, dtype=jnp.int32)
    result = mul_int(lhs, rhs)

    # Batched case: 8 scalar products in one launch.
    N = 8
    lhs_b = jax.random.randint(k3, (N,), minval=-100, maxval=100, dtype=jnp.int32)
    rhs_b = jax.random.randint(k4, (N,), minval=-100, maxval=100, dtype=jnp.int32)
    result_b = mul_int_batched(lhs_b, rhs_b)

    # Single sync + single host readback for verification (no per-call sync).
    jax.block_until_ready((result, result_b))

    expected = int(lhs) * int(rhs)
    assert int(result) == expected, f"got {int(result)}, expected {expected}"
    assert bool(jnp.all(result_b == lhs_b * rhs_b)), "batched products mismatch"
    print("KERNEL_OK")
</pallas_src>

<mosaic_0001>
module attributes {stable_mosaic.version = 11 : i64} {
  func.func @_mul_int_kernel(%arg0: memref<1xi32, #tpu.memory_space<smem>>, %arg1: memref<1xi32, #tpu.memory_space<smem>>, %arg2: memref<1xi32, #tpu.memory_space<smem>>) attributes {dimension_semantics = [], scalar_prefetch = 0 : i64, scratch_operands = 0 : i64, tpu.core_type = #tpu.core_type<tc>} {
    %c0 = arith.constant 0 : index
    %0 = memref.load %arg0[%c0] : memref<1xi32, #tpu.memory_space<smem>>
    %c0_0 = arith.constant 0 : index
    %1 = memref.load %arg1[%c0_0] : memref<1xi32, #tpu.memory_space<smem>>
    %2 = arith.muli %0, %1 : i32
    %c0_1 = arith.constant 0 : index
    %3 = memref.load %arg2[%c0_1] : memref<1xi32, #tpu.memory_space<smem>>
    memref.store %2, %arg2[%c0_1] : memref<1xi32, #tpu.memory_space<smem>>
    return
  }
}

</mosaic_0001>

<llo_original>
// kernel: mul_int.1
$region0: #{mul_int.1}
  #allocation0 [shape = 'u32[]', space=smem, size = 0x4, offset = 0x4, fixed_abs, tag = 'smem constant byte address 0x4 - core index']
  #allocation1 [shape = 'u32[144,128]{1,0:T(1,128)}', space=vmem, size = 0x12000, scoped, tag = 'internal scratch']
  #allocation2 [shape = 's32[1]{0:T(128)S(6)}', space=smem, size = 0x200, scoped, tag = 'scoped memory for mul_int.1']
  #allocation3 [shape = 's32[1]{0:T(128)S(6)}', space=smem, size = 0x200, scoped, tag = 'scoped memory for mul_int.1']
  %s0 = inlined_call_operand.<no memory space> [shape: s32[1], index: 0, kind: input, shape index: {}]
  %s1 = inlined_call_operand.<no memory space> [shape: s32[1], index: 1, kind: input, shape index: {}]
  %s2 = inlined_call_operand.hbm [shape: s32[1], index: 2, kind: output, shape index: {}]
  %s3 = sld [smem:[#allocation0]]
  $region18: #{mul_int.1} parent=0
    _
  %s5 = ssub.s32 1, %s3
  %s6 = scalar_select 0, %s5, %s3
  %7 = sst [smem:[#allocation2]] %s0
  %8 = sst [smem:[#allocation3]] %s1
  $region1: #{mul_int.1} parent=0
    #allocation4 [shape = 'u8[512]{0}', space=smem, size = 0x200, scoped, tag = 'output window, operand 0, single buffered']
    #allocation5 [shape = 's32[1]{0}', space=sflag, size = 0x4, scoped, tag = 'scoped memory for mul_int.1']
    %9 = vsyncpa [#allocation5], 0
    // Predicated region
    $region2: #{mul_int.1} parent=1 // pred_check
      _
    $region3: #{mul_int.1} parent=1 // pred_check_branch
      %11 = sbr.rel (0) target = $region5
    $region4: #{mul_int.1} parent=1 // pred_region
      _
    $region5: #{mul_int.1} parent=1 // pred_fallthru
      _
    // Predicated region
    $region6: #{mul_int.1} parent=1 // pred_check
      _
    $region7: #{mul_int.1} parent=1 // pred_check_branch
      %13 = sbr.rel (0) target = $region9
    $region8: #{mul_int.1} parent=1 // pred_region
      _
    $region9: #{mul_int.1} parent=1 // pred_fallthru
      _
    %s14 = sld [smem:[#allocation2]]
    %s15 = sld [smem:[#allocation3]]
    %s16 = smul.u32 %s14, %s15
    %s17 = scalar_lea.smem [#allocation4], 0
    %18 = sst [smem:[%s17]] %s16
    // Predicated region
    $region10: #{mul_int.1} parent=1 // pred_check
      _
    $region11: #{mul_int.1} parent=1 // pred_check_branch
      %20 = sbr.rel (0) target = $region13
    $region12: #{mul_int.1} parent=1 // pred_region
      %s22 = ssub.s32 16, 16
      %23 = vsyncadd [#allocation5], %s22
      %26 = dma.smem_to_hbm [#allocation4], 16, %s2, [#allocation5]
    $region13: #{mul_int.1} parent=1 // pred_fallthru
      _
    // Predicated region
    $region14: #{mul_int.1} parent=1 // pred_check
      _
    $region15: #{mul_int.1} parent=1 // pred_check_branch
      %28 = sbr.rel (0) target = $region17
    $region16: #{mul_int.1} parent=1 // pred_region
      %29 = dma.done [#allocation5], 16
    $region17: #{mul_int.1} parent=1 // pred_fallthru
      _
    %30 = sfence
    %31 = vsyncpa [#allocation5], 1

</llo_original>
